<compile_context>
chip_gen: v6e
topology: v6e:2x2x1
jax: 0.10.0
libtpu: 0.0.40
codegen_flags: <defaults>
</compile_context>

<pallas_src>
import math

import jax
import jax.numpy as jnp
from jax.experimental import pallas as pl
from jax.experimental.pallas import tpu as pltpu

LANE = 128


def _make_tangent_kernel(order):
    """Build a kernel for a fixed (static) tensor order >= 1."""

    def kernel(e_ref, x_ref, o_ref):
        # e_ref: (2, 3, Tv, 128)       tangent basis components (per vertex)
        # x_ref: (2**order, Tv, 128)   tangent-space components (flattened A)
        # o_ref: (3**order, Tv, 128)   3D components (flattened I)

        # Hoist the six e[a, i] slabs into vregs once (6 vector loads total).
        e = tuple(tuple(e_ref[a, i] for i in range(3)) for a in range(2))

        # Mode-by-mode factorized contraction.
        # cur is a flat list over the remaining binary indices (row-major,
        # A_0 most significant) x the already-produced ternary indices.
        cur = [x_ref[a] for a in range(2 ** order)]
        pow3 = 1
        for _ in range(order):
            n_bin = len(cur) // (2 * pow3)
            nxt = []
            for p in range(n_bin):          # remaining binary prefix
                for j in range(3):          # new ternary index
                    for q in range(pow3):   # existing ternary suffix
                        lo = cur[(2 * p) * pow3 + q]
                        hi = cur[(2 * p + 1) * pow3 + q]
                        # acc initialized from the first term (no zeros+add).
                        nxt.append(e[0][j] * lo + e[1][j] * hi)
            cur = nxt
            pow3 *= 3

        for out_idx in range(3 ** order):
            o_ref[out_idx] = cur[out_idx]

    return kernel


def prepare_tangent_basis(e, dtype=jnp.float32, tile_chunks=16):
    """One-time (per mesh) packing of the tangent basis.

    e: (2, V, 3) with e[0] = e2, e[1] = e1.
    Returns (e_packed, (V, V_pad, tv)) where e_packed has shape
    (2, 3, V_pad // 128, 128) — vertices folded into (sublane, lane).
    """
    V = e.shape[1]
    chunks = max(1, -(-V // LANE))
    tv = min(tile_chunks, chunks)               # tile = tv * 128 vertices
    chunks_pad = -(-chunks // tv) * tv          # grid divides evenly
    V_pad = chunks_pad * LANE

    e_t = jnp.transpose(jnp.asarray(e, dtype=dtype), (0, 2, 1))  # (2, 3, V)
    if V_pad != V:
        e_t = jnp.pad(e_t, ((0, 0), (0, 0), (0, V_pad - V)))
    e_packed = e_t.reshape(2, 3, chunks_pad, LANE)
    return e_packed, (V, V_pad, tv)


def tangent_space_transform(X, basis):
    """Equivalent of TangentSpaceTransformer.transform / forward.

    X:     array of shape [2]*order + [V]  (tangent-space tensor field)
    basis: either the raw e array (2, V, 3) or the cached result of
           prepare_tangent_basis(e, ...).
    returns: array of shape [3]*order + [V]
    """
    if isinstance(basis, tuple):
        e_packed, (V, V_pad, tv) = basis
    else:
        e_packed, (V, V_pad, tv) = prepare_tangent_basis(basis, dtype=X.dtype)

    n_components = X.size // V
    order = int(round(math.log2(n_components))) if n_components > 1 else 0
    if order == 0:
        # N is the identity for order 0.
        return X.reshape(V)

    chunks_pad = V_pad // LANE
    n_in, n_out = 2 ** order, 3 ** order

    # Compute in the basis dtype (bf16 stays bf16 on v6e/v7x; f32 stays f32).
    x2 = X.reshape(n_in, V).astype(e_packed.dtype)
    if V_pad != V:
        x2 = jnp.pad(x2, ((0, 0), (0, V_pad - V)))
    x3 = x2.reshape(n_in, chunks_pad, LANE)

    grid = chunks_pad // tv

    # Factorized flop count per vertex (2 muls + 1 add per produced entry).
    flops_per_v = sum(3 * (2 ** (order - 1 - s)) * (3 ** (s + 1))
                      for s in range(order))
    itemsize = e_packed.dtype.itemsize
    bytes_accessed = (6 + n_in + n_out) * V_pad * itemsize

    kernel = _make_tangent_kernel(order)
    out = pl.pallas_call(
        kernel,
        out_shape=jax.ShapeDtypeStruct((n_out, chunks_pad, LANE), e_packed.dtype),
        grid_spec=pltpu.PrefetchScalarGridSpec(
            num_scalar_prefetch=0,
            grid=(grid,),
            in_specs=[
                pl.BlockSpec((2, 3, tv, LANE), lambda v: (0, 0, v, 0)),
                pl.BlockSpec((n_in, tv, LANE), lambda v: (0, v, 0)),
            ],
            out_specs=pl.BlockSpec((n_out, tv, LANE), lambda v: (0, v, 0)),
        ),
        compiler_params=pltpu.CompilerParams(
            dimension_semantics=("parallel",)),
        cost_estimate=pl.CostEstimate(
            flops=int(flops_per_v * V_pad),
            transcendentals=0,
            bytes_accessed=int(bytes_accessed)),
    )(e_packed, x3)

    out = out.reshape(n_out, V_pad)
    if V_pad != V:
        out = out[:, :V]
    return out.reshape([3] * order + [V]).astype(X.dtype)


if __name__ == "__main__":
    key = jax.random.PRNGKey(0)
    V = 512  # number of mesh vertices (small, multiple of 128)

    # Deterministic synthetic tangent basis (stand-in for the .mat geometry):
    # e[0] = e2, e[1] = e1, each (V, 3), unit-normalized per vertex.
    k_e, k_x1, k_x2, k_e3, k_x3 = jax.random.split(key, 5)
    e = jax.random.normal(k_e, (2, V, 3), dtype=jnp.float32)
    e = e / jnp.linalg.norm(e, axis=-1, keepdims=True)

    # Order-1 input: tangent vector field (2, V); order-2: rank-2 tensor (2, 2, V).
    X1 = jax.random.normal(k_x1, (2, V), dtype=jnp.float32)
    X2 = jax.random.normal(k_x2, (2, 2, V), dtype=jnp.float32)

    # Basis packed ONCE per mesh (transpose/cast hoisted out of the call path).
    basis = prepare_tangent_basis(e, dtype=jnp.float32)

    out1 = jax.block_until_ready(tangent_space_transform(X1, basis))
    out2 = jax.block_until_ready(tangent_space_transform(X2, basis))

    # Pure-JAX references of N[order].T @ X.flatten()
    ref1 = jnp.einsum('avi,av->iv', e, X1)
    ref2 = jnp.einsum('avi,bvj,abv->ijv', e, e, X2)

    assert out1.shape == (3, V)
    assert out2.shape == (3, 3, V)
    assert jnp.allclose(out1, ref1, atol=1e-5, rtol=1e-5)
    assert jnp.allclose(out2, ref2, atol=1e-5, rtol=1e-5)

    # Non-multiple-of-128 vertex count exercises the padding path.
    V3 = 300
    e3 = jax.random.normal(k_e3, (2, V3, 3), dtype=jnp.float32)
    e3 = e3 / jnp.linalg.norm(e3, axis=-1, keepdims=True)
    X3 = jax.random.normal(k_x3, (2, V3), dtype=jnp.float32)
    basis3 = prepare_tangent_basis(e3, dtype=jnp.float32)
    out3 = jax.block_until_ready(tangent_space_transform(X3, basis3))
    ref3 = jnp.einsum('avi,av->iv', e3, X3)
    assert out3.shape == (3, V3)
    assert jnp.allclose(out3, ref3, atol=1e-5, rtol=1e-5)

    print("KERNEL_OK")
</pallas_src>

<mosaic_0001>
module attributes {stable_mosaic.version = 11 : i64} {
  func.func @kernel(%arg0: i32, %arg1: memref<2x3x4x128xf32, #tpu.memory_space<vmem>>, %arg2: memref<2x4x128xf32, #tpu.memory_space<vmem>>, %arg3: memref<3x4x128xf32, #tpu.memory_space<vmem>>) attributes {dimension_semantics = [#tpu.dimension_semantics<parallel>], iteration_bounds = array<i64: 1>, scalar_prefetch = 0 : i64, scratch_operands = 0 : i64, tpu.core_type = #tpu.core_type<tc>, window_params = [{transform_indices = @transform_0, window_bounds = array<i64: 2, 3, 4, 128>}, {transform_indices = @transform_1, window_bounds = array<i64: 2, 4, 128>}, {transform_indices = @transform_2, window_bounds = array<i64: 3, 4, 128>}]} {
    %c0 = arith.constant 0 : index
    %c0_0 = arith.constant 0 : index
    %c0_1 = arith.constant 0 : index
    %c0_2 = arith.constant 0 : index
    %0 = vector.load %arg1[%c0, %c0_0, %c0_1, %c0_2] : memref<2x3x4x128xf32, #tpu.memory_space<vmem>>, vector<1x1x4x128xf32>
    %1 = vector.shape_cast %0 : vector<1x1x4x128xf32> to vector<4x128xf32>
    %c0_3 = arith.constant 0 : index
    %c1 = arith.constant 1 : index
    %c0_4 = arith.constant 0 : index
    %c0_5 = arith.constant 0 : index
    %2 = vector.load %arg1[%c0_3, %c1, %c0_4, %c0_5] : memref<2x3x4x128xf32, #tpu.memory_space<vmem>>, vector<1x1x4x128xf32>
    %3 = vector.shape_cast %2 : vector<1x1x4x128xf32> to vector<4x128xf32>
    %c0_6 = arith.constant 0 : index
    %c2 = arith.constant 2 : index
    %c0_7 = arith.constant 0 : index
    %c0_8 = arith.constant 0 : index
    %4 = vector.load %arg1[%c0_6, %c2, %c0_7, %c0_8] : memref<2x3x4x128xf32, #tpu.memory_space<vmem>>, vector<1x1x4x128xf32>
    %5 = vector.shape_cast %4 : vector<1x1x4x128xf32> to vector<4x128xf32>
    %c1_9 = arith.constant 1 : index
    %c0_10 = arith.constant 0 : index
    %c0_11 = arith.constant 0 : index
    %c0_12 = arith.constant 0 : index
    %6 = vector.load %arg1[%c1_9, %c0_10, %c0_11, %c0_12] : memref<2x3x4x128xf32, #tpu.memory_space<vmem>>, vector<1x1x4x128xf32>
    %7 = vector.shape_cast %6 : vector<1x1x4x128xf32> to vector<4x128xf32>
    %c1_13 = arith.constant 1 : index
    %c1_14 = arith.constant 1 : index
    %c0_15 = arith.constant 0 : index
    %c0_16 = arith.constant 0 : index
    %8 = vector.load %arg1[%c1_13, %c1_14, %c0_15, %c0_16] : memref<2x3x4x128xf32, #tpu.memory_space<vmem>>, vector<1x1x4x128xf32>
    %9 = vector.shape_cast %8 : vector<1x1x4x128xf32> to vector<4x128xf32>
    %c1_17 = arith.constant 1 : index
    %c2_18 = arith.constant 2 : index
    %c0_19 = arith.constant 0 : index
    %c0_20 = arith.constant 0 : index
    %10 = vector.load %arg1[%c1_17, %c2_18, %c0_19, %c0_20] : memref<2x3x4x128xf32, #tpu.memory_space<vmem>>, vector<1x1x4x128xf32>
    %11 = vector.shape_cast %10 : vector<1x1x4x128xf32> to vector<4x128xf32>
    %c0_21 = arith.constant 0 : index
    %c0_22 = arith.constant 0 : index
    %c0_23 = arith.constant 0 : index
    %12 = vector.load %arg2[%c0_21, %c0_22, %c0_23] : memref<2x4x128xf32, #tpu.memory_space<vmem>>, vector<1x4x128xf32>
    %13 = vector.shape_cast %12 : vector<1x4x128xf32> to vector<4x128xf32>
    %c1_24 = arith.constant 1 : index
    %c0_25 = arith.constant 0 : index
    %c0_26 = arith.constant 0 : index
    %14 = vector.load %arg2[%c1_24, %c0_25, %c0_26] : memref<2x4x128xf32, #tpu.memory_space<vmem>>, vector<1x4x128xf32>
    %15 = vector.shape_cast %14 : vector<1x4x128xf32> to vector<4x128xf32>
    %16 = arith.mulf %1, %13 : vector<4x128xf32>
    %17 = arith.mulf %7, %15 : vector<4x128xf32>
    %18 = arith.addf %16, %17 : vector<4x128xf32>
    %19 = arith.mulf %3, %13 : vector<4x128xf32>
    %20 = arith.mulf %9, %15 : vector<4x128xf32>
    %21 = arith.addf %19, %20 : vector<4x128xf32>
    %22 = arith.mulf %5, %13 : vector<4x128xf32>
    %23 = arith.mulf %11, %15 : vector<4x128xf32>
    %24 = arith.addf %22, %23 : vector<4x128xf32>
    %c0_27 = arith.constant 0 : index
    %c0_28 = arith.constant 0 : index
    %c0_29 = arith.constant 0 : index
    %25 = vector.load %arg3[%c0_27, %c0_28, %c0_29] : memref<3x4x128xf32, #tpu.memory_space<vmem>>, vector<1x4x128xf32>
    %26 = vector.shape_cast %25 : vector<1x4x128xf32> to vector<4x128xf32>
    %27 = vector.shape_cast %18 : vector<4x128xf32> to vector<1x4x128xf32>
    tpu.vector_store %arg3[%c0_27, %c0_28, %c0_29], %27 {strides = array<i32>} : memref<3x4x128xf32, #tpu.memory_space<vmem>>, vector<1x4x128xf32>,
    %c1_30 = arith.constant 1 : index
    %c0_31 = arith.constant 0 : index
    %c0_32 = arith.constant 0 : index
    %28 = vector.load %arg3[%c1_30, %c0_31, %c0_32] : memref<3x4x128xf32, #tpu.memory_space<vmem>>, vector<1x4x128xf32>
    %29 = vector.shape_cast %28 : vector<1x4x128xf32> to vector<4x128xf32>
    %30 = vector.shape_cast %21 : vector<4x128xf32> to vector<1x4x128xf32>
    tpu.vector_store %arg3[%c1_30, %c0_31, %c0_32], %30 {strides = array<i32>} : memref<3x4x128xf32, #tpu.memory_space<vmem>>, vector<1x4x128xf32>,
    %c2_33 = arith.constant 2 : index
    %c0_34 = arith.constant 0 : index
    %c0_35 = arith.constant 0 : index
    %31 = vector.load %arg3[%c2_33, %c0_34, %c0_35] : memref<3x4x128xf32, #tpu.memory_space<vmem>>, vector<1x4x128xf32>
    %32 = vector.shape_cast %31 : vector<1x4x128xf32> to vector<4x128xf32>
    %33 = vector.shape_cast %24 : vector<4x128xf32> to vector<1x4x128xf32>
    tpu.vector_store %arg3[%c2_33, %c0_34, %c0_35], %33 {strides = array<i32>} : memref<3x4x128xf32, #tpu.memory_space<vmem>>, vector<1x4x128xf32>,
    return
  }
  func.func @transform_0(%arg0: i32) -> (i32, i32, i32, i32) {
    %c0_i32 = arith.constant 0 : i32
    %c0_i32_0 = arith.constant 0 : i32
    %c0_i32_1 = arith.constant 0 : i32
    %c0_i32_2 = arith.constant 0 : i32
    return %c0_i32, %c0_i32_0, %arg0, %c0_i32_1 : i32, i32, i32, i32
  }
  func.func @transform_1(%arg0: i32) -> (i32, i32, i32) {
    %c0_i32 = arith.constant 0 : i32
    %c0_i32_0 = arith.constant 0 : i32
    %c0_i32_1 = arith.constant 0 : i32
    return %c0_i32, %arg0, %c0_i32_0 : i32, i32, i32
  }
  func.func @transform_2(%arg0: i32) -> (i32, i32, i32) {
    %c0_i32 = arith.constant 0 : i32
    %c0_i32_0 = arith.constant 0 : i32
    %c0_i32_1 = arith.constant 0 : i32
    return %c0_i32, %arg0, %c0_i32_0 : i32, i32, i32
  }
}

</mosaic_0001>

<llo_original>
// kernel: tpu_custom_call.1
$region0: #{tpu_custom_call.1}
  #allocation0 [shape = 'u32[]', space=smem, size = 0x4, offset = 0x4, fixed_abs, tag = 'smem constant byte address 0x4 - core index']
  #allocation1 [shape = 'u32[144,128]{1,0:T(1,128)}', space=vmem, size = 0x12000, scoped, tag = 'internal scratch']
  %s0 = inlined_call_operand.hbm [shape: f32[2,3,4,128], index: 0, kind: input, shape index: {}]
  %s1 = inlined_call_operand.hbm [shape: f32[2,4,128], index: 1, kind: input, shape index: {}]
  %s2 = inlined_call_operand.hbm [shape: f32[3,4,128], index: 2, kind: output, shape index: {}]
  %s3 = sld [smem:[#allocation0]]
  $region26: #{tpu_custom_call.1} parent=0
    _
  %s5 = ssub.s32 1, %s3
  %s6 = scalar_select 0, %s5, %s3
  $region1: #{tpu_custom_call.1} parent=0
    #allocation2 [shape = 'u8[12288]{0}', space=vmem, size = 0x3000, scoped, tag = 'input window, operand 0, single buffered']
    #allocation3 [shape = 's32[1]{0}', space=sflag, size = 0x4, scoped, tag = 'scoped memory for tpu_custom_call.1']
    #allocation4 [shape = 's32[1]{0}', space=sflag, size = 0x4, scoped, tag = 'scoped memory for tpu_custom_call.1']
    #allocation5 [shape = 'u8[4096]{0}', space=vmem, size = 0x1000, scoped, tag = 'input window, operand 1, single buffered']
    #allocation6 [shape = 's32[1]{0}', space=sflag, size = 0x4, scoped, tag = 'scoped memory for tpu_custom_call.1']
    #allocation7 [shape = 'u8[6144]{0}', space=vmem, size = 0x1800, scoped, tag = 'output window, operand 0, single buffered']
    %7 = vsyncpa [#allocation3], 0
    %8 = vsyncpa [#allocation6], 0
    %9 = vsyncpa [#allocation4], 0
    // Predicated region
    $region2: #{tpu_custom_call.1} parent=1 // pred_check
      _
    $region3: #{tpu_custom_call.1} parent=1 // pred_check_branch
      %11 = sbr.rel (0) target = $region5
    $region4: #{tpu_custom_call.1} parent=1 // pred_region
      %s13 = ssub.s32 384, 384
      %14 = vsyncadd [#allocation3], %s13
      %s15 = sshll.u32 [#allocation2], 4
      %s16 = int_to_ptr.vmem [resolvable:$true] %s15
      %21 = dma.hbm_to_vmem [thread:$0]  %s0, 384, %s16, [#allocation3], 64, 64, 4
    $region5: #{tpu_custom_call.1} parent=1 // pred_fallthru
      _
    // Predicated region
    $region6: #{tpu_custom_call.1} parent=1 // pred_check
      _
    $region7: #{tpu_custom_call.1} parent=1 // pred_check_branch
      %23 = sbr.rel (0) target = $region9
    $region8: #{tpu_custom_call.1} parent=1 // pred_region
      %s25 = ssub.s32 128, 128
      %26 = vsyncadd [#allocation6], %s25
      %s27 = sshll.u32 [#allocation5], 4
      %s28 = int_to_ptr.vmem [resolvable:$true] %s27
      %33 = dma.hbm_to_vmem [thread:$0]  %s1, 128, %s28, [#allocation6], 64, 64, 4
    $region9: #{tpu_custom_call.1} parent=1 // pred_fallthru
      _
    // Predicated region
    $region10: #{tpu_custom_call.1} parent=1 // pred_check
      _
    $region11: #{tpu_custom_call.1} parent=1 // pred_check_branch
      %35 = sbr.rel (0) target = $region13
    $region12: #{tpu_custom_call.1} parent=1 // pred_region
      %36 = dma.done [#allocation3], 384
    $region13: #{tpu_custom_call.1} parent=1 // pred_fallthru
      _
    // Predicated region
    $region14: #{tpu_custom_call.1} parent=1 // pred_check
      _
    $region15: #{tpu_custom_call.1} parent=1 // pred_check_branch
      %38 = sbr.rel (0) target = $region17
    $region16: #{tpu_custom_call.1} parent=1 // pred_region
      %39 = dma.done [#allocation6], 128
    $region17: #{tpu_custom_call.1} parent=1 // pred_fallthru
      _
    %v40 = vld [vmem:[#allocation2] sm:$0xf]
    %s41 = scalar_lea.vmem [#allocation2], 4
    %v42 = vld [vmem:[%s41] sm:$0xf]
    %s43 = scalar_lea.vmem [#allocation2], 8
    %v44 = vld [vmem:[%s43] sm:$0xf]
    %s45 = scalar_lea.vmem [#allocation2], 12
    %v46 = vld [vmem:[%s45] sm:$0xf]
    %s47 = scalar_lea.vmem [#allocation2], 16
    %v48 = vld [vmem:[%s47] sm:$0xf]
    %s49 = scalar_lea.vmem [#allocation2], 20
    %v50 = vld [vmem:[%s49] sm:$0xf]
    %v51 = vld [vmem:[#allocation5] sm:$0xf]
    %s52 = scalar_lea.vmem [#allocation5], 4
    %v53 = vld [vmem:[%s52] sm:$0xf]
    %v54 = vmul.f32 %v40, %v51
    %v55 = vmul.f32 %v46, %v53
    %v56 = vadd.f32 %v54, %v55
    %v57 = vmul.f32 %v42, %v51
    %v58 = vmul.f32 %v48, %v53
    %v59 = vadd.f32 %v57, %v58
    %v60 = vmul.f32 %v44, %v51
    %v61 = vmul.f32 %v50, %v53
    %v62 = vadd.f32 %v60, %v61
    %63 = vst [vmem:[#allocation7] sm:$0xf] %v56
    %s64 = scalar_lea.vmem [#allocation7], 4
    %65 = vst [vmem:[%s64] sm:$0xf] %v59
    %s66 = scalar_lea.vmem [#allocation7], 8
    %67 = vst [vmem:[%s66] sm:$0xf] %v62
    // Predicated region
    $region18: #{tpu_custom_call.1} parent=1 // pred_check
      _
    $region19: #{tpu_custom_call.1} parent=1 // pred_check_branch
      %69 = sbr.rel (0) target = $region21
    $region20: #{tpu_custom_call.1} parent=1 // pred_region
      %s71 = ssub.s32 192, 192
      %72 = vsyncadd [#allocation4], %s71
      %s73 = sshll.u32 [#allocation7], 4
      %s74 = int_to_ptr.vmem [resolvable:$true] %s73
      %79 = dma.vmem_to_hbm [thread:$0]  %s74, 192, %s2, [#allocation4], 64, 64, 4
    $region21: #{tpu_custom_call.1} parent=1 // pred_fallthru
      _
    // Predicated region
    $region22: #{tpu_custom_call.1} parent=1 // pred_check
      _
    $region23: #{tpu_custom_call.1} parent=1 // pred_check_branch
      %81 = sbr.rel (0) target = $region25
    $region24: #{tpu_custom_call.1} parent=1 // pred_region
      %82 = dma.done [#allocation4], 192
    $region25: #{tpu_custom_call.1} parent=1 // pred_fallthru
      _
    %83 = vsyncpa [#allocation3], 1
    %84 = vsyncpa [#allocation6], 1
    %85 = vsyncpa [#allocation4], 1

</llo_original>
